<compile_context>
chip_gen: v5e
topology: v5e:2x2
jax: 0.10.0
libtpu: 0.0.40
codegen_flags: <defaults>
</compile_context>

<pallas_src>
import jax
import jax.numpy as jnp
from jax.experimental import pallas as pl
from jax.experimental.pallas import tpu as pltpu


def _null_model_kernel(row_ref, o_ref):
    # row_ref: (n_classes, 1)   fused per-class value  W[:, 0] + b
    # o_ref  : (n_classes, TB)  transposed output tile; batch on lanes (lane-dense)
    o_ref[...] = jnp.broadcast_to(row_ref[...], o_ref.shape)


def null_model_forward(x, weight, bias, *, batch_tile=1024):
    """x: (batch, n_channels, n_samples) -- contents ignored (as in the PyTorch model).
    weight: (n_classes, 1), bias: (n_classes,)  -- nn.Linear(1, n_classes) params.
    Returns (batch, n_classes) float32."""
    batch_size = x.shape[0]
    n_classes = weight.shape[0]

    # Fuse W^T + b once in the wrapper: column vector of per-class outputs.
    row = (weight.astype(jnp.float32).reshape(n_classes, 1)
           + bias.astype(jnp.float32).reshape(n_classes, 1))          # (n_classes, 1)

    # Batch tile: full batch if small, otherwise a 128-multiple tile (default 1024).
    tb = batch_size if batch_size <= batch_tile else batch_tile
    grid = (pl.cdiv(batch_size, tb),)

    out_t = pl.pallas_call(
        _null_model_kernel,
        out_shape=jax.ShapeDtypeStruct((n_classes, batch_size), jnp.float32),
        grid_spec=pltpu.PrefetchScalarGridSpec(
            num_scalar_prefetch=0,
            grid=grid,
            in_specs=[
                # Fused row stays resident across all batch tiles.
                pl.BlockSpec((n_classes, 1), lambda i: (0, 0)),
            ],
            out_specs=pl.BlockSpec((n_classes, tb), lambda i: (0, i)),
        ),
        compiler_params=pltpu.CompilerParams(
            # Batch tiles are independent -> megacore sharding on v7x.
            dimension_semantics=("parallel",),
        ),
    )(row)

    # Lane-dense kernel layout (n_classes, batch) -> PyTorch (batch, n_classes).
    return out_t.T


if __name__ == "__main__":
    # Small shapes consistent with the module: NullModel(n_channels=4, n_samples=16, n_classes=2)
    batch, n_channels, n_samples, n_classes = 2, 4, 16, 2

    key = jax.random.PRNGKey(0)
    kx, kw, kb = jax.random.split(key, 3)

    # Input (ignored by the model, but shaped as the module implies).
    x = jax.random.normal(kx, (batch, n_channels, n_samples), dtype=jnp.float32)

    # Deterministic nn.Linear(1, n_classes) init: U(-1/sqrt(in), 1/sqrt(in)) with in=1.
    weight = jax.random.uniform(kw, (n_classes, 1), minval=-1.0, maxval=1.0, dtype=jnp.float32)
    bias = jax.random.uniform(kb, (n_classes,), minval=-1.0, maxval=1.0, dtype=jnp.float32)

    out = null_model_forward(x, weight, bias)
    out = jax.block_until_ready(out)

    # Reference check in plain JAX: ones(batch,1) @ W^T + b
    ref = jnp.ones((batch, 1), jnp.float32) @ weight.T + bias
    assert out.shape == (batch, n_classes)
    assert jnp.allclose(out, ref, atol=1e-6), (out, ref)

    print("KERNEL_OK")
</pallas_src>

<mosaic_0001>
module attributes {stable_mosaic.version = 11 : i64} {
  func.func @_null_model_kernel(%arg0: i32, %arg1: memref<2x1xf32, #tpu.memory_space<vmem>>, %arg2: memref<2x2xf32, #tpu.memory_space<vmem>>) attributes {dimension_semantics = [#tpu.dimension_semantics<parallel>], iteration_bounds = array<i64: 1>, scalar_prefetch = 0 : i64, scratch_operands = 0 : i64, tpu.core_type = #tpu.core_type<tc>, window_params = [{pipeline_mode = #tpu.pipeline_mode<synchronous>, transform_indices = @transform_0, window_bounds = array<i64: 2, 1>}, {transform_indices = @transform_1, window_bounds = array<i64: 2, 2>}]} {
    %c0 = arith.constant 0 : index
    %c0_0 = arith.constant 0 : index
    %0 = vector.load %arg1[%c0, %c0_0] : memref<2x1xf32, #tpu.memory_space<vmem>>, vector<2x1xf32>
    %1 = vector.shape_cast %0 : vector<2x1xf32> to vector<2x1xf32>
    %2 = vector.broadcast %1 : vector<2x1xf32> to vector<2x2xf32>
    %c0_1 = arith.constant 0 : index
    %c0_2 = arith.constant 0 : index
    %3 = vector.load %arg2[%c0_1, %c0_2] : memref<2x2xf32, #tpu.memory_space<vmem>>, vector<2x2xf32>
    tpu.vector_store %arg2[%c0_1, %c0_2], %2 {strides = array<i32>} : memref<2x2xf32, #tpu.memory_space<vmem>>, vector<2x2xf32>,
    return
  }
  func.func @transform_0(%arg0: i32) -> (i32, i32) {
    %c0_i32 = arith.constant 0 : i32
    %c0_i32_0 = arith.constant 0 : i32
    %c0_i32_1 = arith.constant 0 : i32
    return %c0_i32, %c0_i32_0 : i32, i32
  }
  func.func @transform_1(%arg0: i32) -> (i32, i32) {
    %c0_i32 = arith.constant 0 : i32
    %c0_i32_0 = arith.constant 0 : i32
    return %c0_i32, %arg0 : i32, i32
  }
}

</mosaic_0001>

<llo_original>
// kernel: tpu_custom_call.1
$region0: #{tpu_custom_call.1}
  #allocation0 [shape = 'u32[]', space=smem, size = 0x4, offset = 0x4, fixed_abs, tag = 'smem constant byte address 0x4 - core index']
  #allocation1 [shape = 'u32[72,128]{1,0:T(1,128)}', space=vmem, size = 0x9000, scoped, tag = 'internal scratch']
  %s0 = inlined_call_operand.vmem [shape: f32[2,1], index: 0, kind: input, shape index: {}]
  %s1 = inlined_call_operand.hbm [shape: f32[2,2], index: 1, kind: output, shape index: {}]
  %s2 = sld [smem:[#allocation0]]
  $region14: #{tpu_custom_call.1} parent=0
    _
  %s4 = ssub.s32 1, %s2
  %s5 = scalar_select 0, %s4, %s2
  $region1: #{tpu_custom_call.1} parent=0
    #allocation2 [shape = 'u8[1024]{0}', space=vmem, size = 0x400, scoped, tag = 'output window, operand 0, single buffered']
    #allocation3 [shape = 's32[1]{0}', space=sflag, size = 0x4, scoped, tag = 'scoped memory for tpu_custom_call.1']
    %6 = vsyncpa [#allocation3], 0
    // Predicated region
    $region2: #{tpu_custom_call.1} parent=1 // pred_check
      _
    $region3: #{tpu_custom_call.1} parent=1 // pred_check_branch
      %8 = sbr.rel (0) target = $region5
    $region4: #{tpu_custom_call.1} parent=1 // pred_region
      _
    $region5: #{tpu_custom_call.1} parent=1 // pred_fallthru
      _
    %v9 = vld [vmem:[%s0] sm:$0x3]
    %11 = vset.pattern.permute.xlu0 0
    %12 = vperm.xlu0 %11, %v9
    %v13 = vpop.permute.xlu0 %12
    %vm15 = vcmask 9216
    %16 = vst.msk [vmem:[#allocation2] sm:$0x3] %vm15, %v13
    // Predicated region
    $region6: #{tpu_custom_call.1} parent=1 // pred_check
      _
    $region7: #{tpu_custom_call.1} parent=1 // pred_check_branch
      %18 = sbr.rel (0) target = $region9
    $region8: #{tpu_custom_call.1} parent=1 // pred_region
      %20 = vsyncadd [#allocation3], 0
      %s22 = sshll.u32 [#allocation2], 4
      %s23 = int_to_ptr.vmem [resolvable:$true] %s22
      %s24 = sshll.u32 %s1, 4
      %s25 = int_to_ptr.hbm [resolvable:$true] %s24
      %27 = dma.vmem_to_hbm [thread:$0]  %s23, 32, %s25, [#allocation3]
    $region9: #{tpu_custom_call.1} parent=1 // pred_fallthru
      _
    // Predicated region
    $region10: #{tpu_custom_call.1} parent=1 // pred_check
      _
    $region11: #{tpu_custom_call.1} parent=1 // pred_check_branch
      %29 = sbr.rel (0) target = $region13
    $region12: #{tpu_custom_call.1} parent=1 // pred_region
      %31 = dma.done [#allocation3], 32
    $region13: #{tpu_custom_call.1} parent=1 // pred_fallthru
      _
    %32 = vsyncpa [#allocation3], 1

</llo_original>
